<compile_context>
chip_gen: v7x
topology: tpu7x:2x2x1
jax: 0.10.0
libtpu: 0.0.40
codegen_flags: <defaults>
</compile_context>

<pallas_src>
import functools

import jax
import jax.numpy as jnp
from jax.experimental import pallas as pl
from jax.experimental.pallas import tpu as pltpu

ALPHA = 0.2  # mvGCN default


def mvgcn_kernel(x_ref, adj1_ref, adj2_ref, adj3_ref, wcat_ref, misc_ref,
                 out_ref, *, H, K):
    f32 = jnp.float32
    x = x_ref[...]        # [N, F]
    adj1 = adj1_ref[...]  # [N, N]
    adj2 = adj2_ref[...]
    adj3 = adj3_ref[...]

    # --- unpack the packed parameter slab (static, 8-aligned slices) ---
    base = H + K
    wg = misc_ref[0:H, :]                       # [H, H]
    mu = misc_ref[H:base, :]                    # [K, H]
    b1 = misc_ref[base + 0:base + 1, :]         # [1, H]
    b2 = misc_ref[base + 1:base + 2, :]
    b3 = misc_ref[base + 2:base + 3, :]
    bg = misc_ref[base + 3:base + 4, :]
    aw = misc_ref[base + 4:base + 5, :]         # [1, H]  attention weight row
    ab = misc_ref[base + 5:base + 6, 0:1]       # [1, 1]  attention bias

    # --- fused per-view projection: ONE MXU push instead of three ---
    support_cat = jnp.dot(x, wcat_ref[...], preferred_element_type=f32)  # [N,3H]

    x1 = jnp.dot(adj1, support_cat[:, 0:H], preferred_element_type=f32) + b1
    x2 = jnp.dot(adj2, support_cat[:, H:2 * H], preferred_element_type=f32) + b2
    x3 = jnp.dot(adj3, support_cat[:, 2 * H:3 * H], preferred_element_type=f32) + b3

    # --- attention scores as VPU reductions (no 1-wide MXU matmuls) ---
    s1 = jnp.sum(x1 * aw, axis=1, keepdims=True) + ab   # [N, 1]
    s2 = jnp.sum(x2 * aw, axis=1, keepdims=True) + ab
    s3 = jnp.sum(x3 * aw, axis=1, keepdims=True) + ab

    # --- elementwise 3-way softmax (no concat, exp + reciprocal on the EUP) ---
    m = jnp.maximum(s1, jnp.maximum(s2, s3))
    e1 = jnp.exp(s1 - m)
    e2 = jnp.exp(s2 - m)
    e3 = jnp.exp(s3 - m)
    denom_inv = pl.reciprocal(e1 + e2 + e3, approx=True)
    beta1 = e1 * denom_inv
    beta2 = e2 * denom_inv
    beta3 = e3 * denom_inv

    # fused (beta * emb).sum(1)
    emb = beta1 * x1 + beta2 * x2 + beta3 * x3            # [N, H]

    # --- fused GraphConvolution on the attended embedding ---
    # torch: adj_mix[i,j] = sum_k adj_k[i,j] * att[j,k]  (column scaling).
    # Use (A * beta_row) @ S == A @ (beta_col * S): no adj_mix temporary,
    # no [N,3] transpose, no 3x N^2 VPU multiplies.
    support = jnp.dot(emb, wg, preferred_element_type=f32)  # [N, H]
    z = (jnp.dot(adj1, beta1 * support, preferred_element_type=f32)
         + jnp.dot(adj2, beta2 * support, preferred_element_type=f32)
         + jnp.dot(adj3, beta3 * support, preferred_element_type=f32)
         + bg)                                              # [N, H]

    # --- Student-t soft assignment q ---
    # ||z_i - mu_k||^2 = ||z_i||^2 + ||mu_k||^2 - 2 z_i . mu_k  (MXU-friendly),
    # clamped at 0 to guard against cancellation when z_i ~ mu_k.
    z_sq = jnp.sum(z * z, axis=1, keepdims=True)            # [N, 1]
    mu_sq = jnp.sum(mu * mu, axis=1)[None, :]               # [1, K]
    cross = jnp.einsum('nh,kh->nk', z, mu,
                       preferred_element_type=f32)          # [N, K]
    d2 = jnp.maximum(z_sq + mu_sq - 2.0 * cross, 0.0)       # [N, K]
    q = 1.0 / (1.0 + d2 / ALPHA + 1e-8)
    q = q ** (ALPHA + 1.0) / 2.0
    q = q / jnp.sum(q, axis=1, keepdims=True)               # [N, K]

    # single lane-dense store: [z | emb | q] -> [N, 2H+K]
    out_ref[...] = jnp.concatenate([z, emb, q], axis=1)


def mvgcn_forward(x, adj1, adj2, adj3, params):
    N, _ = x.shape
    H = params["w1"].shape[1]
    K = params["mu"].shape[0]
    f32 = jnp.float32

    # Pack parameters into two slabs (wrapper-side; one-time cost per call).
    w_cat = jnp.concatenate([params["w1"], params["w2"], params["w3"]], axis=1)
    ab_row = jnp.full((1, H), params["att_b"][0, 0], dtype=f32)
    misc = jnp.concatenate([
        params["wg"],            # rows [0, H)
        params["mu"],            # rows [H, H+K)
        params["b1"],            # row  H+K
        params["b2"],            # row  H+K+1
        params["b3"],            # row  H+K+2
        params["bg"],            # row  H+K+3
        params["att_w"].T,       # row  H+K+4
        ab_row,                  # row  H+K+5 (only element [.,0] used)
    ], axis=0).astype(f32)

    kernel = functools.partial(mvgcn_kernel, H=H, K=K)
    out = pl.pallas_call(
        kernel,
        out_shape=jax.ShapeDtypeStruct((N, 2 * H + K), f32),
        in_specs=[pl.BlockSpec(memory_space=pltpu.MemorySpace.VMEM)] * 6,
        out_specs=pl.BlockSpec(memory_space=pltpu.MemorySpace.VMEM),
    )(x, adj1, adj2, adj3, w_cat, misc)

    z = out[:, 0:H]
    emb = out[:, H:2 * H]
    q = out[:, 2 * H:]
    return z, emb, q


def reference_forward(x, adj1, adj2, adj3, p):
    """Pure-JAX reference mirroring the PyTorch forward exactly."""
    def gc(inp, adj, w, b):
        return adj @ (inp @ w) + b
    x1 = gc(x, adj1, p["w1"], p["b1"])
    x2 = gc(x, adj2, p["w2"], p["b2"])
    x3 = gc(x, adj3, p["w3"], p["b3"])
    emb = jnp.stack([x1, x2, x3], axis=1)                    # [N, 3, H]
    w = emb @ p["att_w"] + p["att_b"]                        # [N, 3, 1]
    beta = jax.nn.softmax(w, axis=1)
    emb_out = (beta * emb).sum(1)                            # [N, H]
    att = jnp.squeeze(beta)                                  # [N, 3]
    adj = adj1 * att[:, 0] + adj2 * att[:, 1] + adj3 * att[:, 2]
    z = gc(emb_out, adj, p["wg"], p["bg"])
    q = 1.0 / (1.0 + jnp.sum((z[:, None, :] - p["mu"]) ** 2, axis=2) / ALPHA + 1e-8)
    q = q ** (ALPHA + 1.0) / 2.0
    q = q / jnp.sum(q, axis=1, keepdims=True)
    return z, emb_out, q


if __name__ == "__main__":
    N, F, H, K = 16, 8, 32, 8   # nodes, nfeat, nhid, n_clusters

    key = jax.random.PRNGKey(0)
    ks = jax.random.split(key, 16)
    f32 = jnp.float32

    x = jax.random.normal(ks[0], (N, F), f32)
    adj1 = jax.random.uniform(ks[1], (N, N), f32)
    adj2 = jax.random.uniform(ks[2], (N, N), f32)
    adj3 = jax.random.uniform(ks[3], (N, N), f32)
    # row-normalize adjacencies (typical GCN preprocessing; keeps values sane)
    adj1 = adj1 / jnp.sum(adj1, axis=1, keepdims=True)
    adj2 = adj2 / jnp.sum(adj2, axis=1, keepdims=True)
    adj3 = adj3 / jnp.sum(adj3, axis=1, keepdims=True)

    params = {
        "w1": 0.1 * jax.random.normal(ks[4], (F, H), f32),
        "b1": 0.1 * jax.random.normal(ks[5], (1, H), f32),
        "w2": 0.1 * jax.random.normal(ks[6], (F, H), f32),
        "b2": 0.1 * jax.random.normal(ks[7], (1, H), f32),
        "w3": 0.1 * jax.random.normal(ks[8], (F, H), f32),
        "b3": 0.1 * jax.random.normal(ks[9], (1, H), f32),
        "att_w": 0.1 * jax.random.normal(ks[10], (H, 1), f32),
        "att_b": 0.1 * jax.random.normal(ks[11], (1, 1), f32),
        "wg": 0.1 * jax.random.normal(ks[12], (H, H), f32),
        "bg": 0.1 * jax.random.normal(ks[13], (1, H), f32),
        # mu is normally initialized by louvain/kmeans in fit(); synthetic here.
        "mu": 0.1 * jax.random.normal(ks[14], (K, H), f32),
    }

    z, emb, q = jax.block_until_ready(
        mvgcn_forward(x, adj1, adj2, adj3, params))

    z_r, emb_r, q_r = reference_forward(x, adj1, adj2, adj3, params)
    # 1e-3 tolerance: the softmax denominator uses the EUP approximate
    # reciprocal (pl.reciprocal(approx=True)); everything else is exact f32.
    assert jnp.allclose(z, z_r, atol=1e-3, rtol=1e-3)
    assert jnp.allclose(emb, emb_r, atol=1e-3, rtol=1e-3)
    assert jnp.allclose(q, q_r, atol=1e-3, rtol=1e-3)

    # TODO(synk): fit()/loss_function/target_distribution are host-side training
    # utilities (SGD loop, louvain/kmeans init) and are out of scope for the
    # forward kernel.
    print("KERNEL_OK")
</pallas_src>

<mosaic_0001>
module attributes {stable_mosaic.version = 11 : i64} {
  func.func @mvgcn_kernel(%arg0: memref<16x8xf32, #tpu.memory_space<vmem>>, %arg1: memref<16x16xf32, #tpu.memory_space<vmem>>, %arg2: memref<16x16xf32, #tpu.memory_space<vmem>>, %arg3: memref<16x16xf32, #tpu.memory_space<vmem>>, %arg4: memref<8x96xf32, #tpu.memory_space<vmem>>, %arg5: memref<46x32xf32, #tpu.memory_space<vmem>>, %arg6: memref<16x72xf32, #tpu.memory_space<vmem>>) attributes {dimension_semantics = [], scalar_prefetch = 0 : i64, scratch_operands = 0 : i64, tpu.core_type = #tpu.core_type<tc>} {
    %c0 = arith.constant 0 : index
    %c0_0 = arith.constant 0 : index
    %0 = vector.load %arg0[%c0, %c0_0] : memref<16x8xf32, #tpu.memory_space<vmem>>, vector<16x8xf32>
    %c0_1 = arith.constant 0 : index
    %c0_2 = arith.constant 0 : index
    %1 = vector.load %arg1[%c0_1, %c0_2] : memref<16x16xf32, #tpu.memory_space<vmem>>, vector<16x16xf32>
    %c0_3 = arith.constant 0 : index
    %c0_4 = arith.constant 0 : index
    %2 = vector.load %arg2[%c0_3, %c0_4] : memref<16x16xf32, #tpu.memory_space<vmem>>, vector<16x16xf32>
    %c0_5 = arith.constant 0 : index
    %c0_6 = arith.constant 0 : index
    %3 = vector.load %arg3[%c0_5, %c0_6] : memref<16x16xf32, #tpu.memory_space<vmem>>, vector<16x16xf32>
    %c0_7 = arith.constant 0 : index
    %c0_8 = arith.constant 0 : index
    %4 = vector.load %arg5[%c0_7, %c0_8] : memref<46x32xf32, #tpu.memory_space<vmem>>, vector<32x32xf32>
    %c32 = arith.constant 32 : index
    %c0_9 = arith.constant 0 : index
    %5 = vector.load %arg5[%c32, %c0_9] : memref<46x32xf32, #tpu.memory_space<vmem>>, vector<8x32xf32>
    %c40 = arith.constant 40 : index
    %c0_10 = arith.constant 0 : index
    %6 = vector.load %arg5[%c40, %c0_10] : memref<46x32xf32, #tpu.memory_space<vmem>>, vector<1x32xf32>
    %c41 = arith.constant 41 : index
    %c0_11 = arith.constant 0 : index
    %7 = vector.load %arg5[%c41, %c0_11] : memref<46x32xf32, #tpu.memory_space<vmem>>, vector<1x32xf32>
    %c42 = arith.constant 42 : index
    %c0_12 = arith.constant 0 : index
    %8 = vector.load %arg5[%c42, %c0_12] : memref<46x32xf32, #tpu.memory_space<vmem>>, vector<1x32xf32>
    %c43 = arith.constant 43 : index
    %c0_13 = arith.constant 0 : index
    %9 = vector.load %arg5[%c43, %c0_13] : memref<46x32xf32, #tpu.memory_space<vmem>>, vector<1x32xf32>
    %c44 = arith.constant 44 : index
    %c0_14 = arith.constant 0 : index
    %10 = vector.load %arg5[%c44, %c0_14] : memref<46x32xf32, #tpu.memory_space<vmem>>, vector<1x32xf32>
    %c45 = arith.constant 45 : index
    %c0_15 = arith.constant 0 : index
    %11 = vector.load %arg5[%c45, %c0_15] : memref<46x32xf32, #tpu.memory_space<vmem>>, vector<1x1xf32>
    %c0_16 = arith.constant 0 : index
    %c0_17 = arith.constant 0 : index
    %12 = vector.load %arg4[%c0_16, %c0_17] : memref<8x96xf32, #tpu.memory_space<vmem>>, vector<8x96xf32>
    %cst = arith.constant dense<0.000000e+00> : vector<16x96xf32>
    %13 = tpu.matmul %0, %12, %cst {dimension_numbers = #tpu.dot_dimension_numbers<[1], [0], [0], [1], [0, 0, 1, 1], [], []>} : vector<16x8xf32>, vector<8x96xf32>, vector<16x96xf32> -> vector<16x96xf32>
    %14 = vector.extract_strided_slice %13 {offsets = [0, 0], sizes = [16, 32], strides = [1, 1]} : vector<16x96xf32> to vector<16x32xf32>
    %cst_18 = arith.constant dense<0.000000e+00> : vector<16x32xf32>
    %15 = tpu.matmul %1, %14, %cst_18 {dimension_numbers = #tpu.dot_dimension_numbers<[1], [0], [0], [1], [0, 0, 1, 1], [], []>} : vector<16x16xf32>, vector<16x32xf32>, vector<16x32xf32> -> vector<16x32xf32>
    %16 = vector.broadcast %6 : vector<1x32xf32> to vector<16x32xf32>
    %17 = arith.addf %15, %16 : vector<16x32xf32>
    %18 = vector.extract_strided_slice %13 {offsets = [0, 32], sizes = [16, 32], strides = [1, 1]} : vector<16x96xf32> to vector<16x32xf32>
    %cst_19 = arith.constant dense<0.000000e+00> : vector<16x32xf32>
    %19 = tpu.matmul %2, %18, %cst_19 {dimension_numbers = #tpu.dot_dimension_numbers<[1], [0], [0], [1], [0, 0, 1, 1], [], []>} : vector<16x16xf32>, vector<16x32xf32>, vector<16x32xf32> -> vector<16x32xf32>
    %20 = vector.broadcast %7 : vector<1x32xf32> to vector<16x32xf32>
    %21 = arith.addf %19, %20 : vector<16x32xf32>
    %22 = vector.extract_strided_slice %13 {offsets = [0, 64], sizes = [16, 32], strides = [1, 1]} : vector<16x96xf32> to vector<16x32xf32>
    %cst_20 = arith.constant dense<0.000000e+00> : vector<16x32xf32>
    %23 = tpu.matmul %3, %22, %cst_20 {dimension_numbers = #tpu.dot_dimension_numbers<[1], [0], [0], [1], [0, 0, 1, 1], [], []>} : vector<16x16xf32>, vector<16x32xf32>, vector<16x32xf32> -> vector<16x32xf32>
    %24 = vector.broadcast %8 : vector<1x32xf32> to vector<16x32xf32>
    %25 = arith.addf %23, %24 : vector<16x32xf32>
    %26 = vector.broadcast %10 : vector<1x32xf32> to vector<16x32xf32>
    %27 = arith.mulf %17, %26 : vector<16x32xf32>
    %cst_21 = arith.constant dense<0.000000e+00> : vector<16xf32>
    %28 = vector.multi_reduction <add>, %27, %cst_21 [1] : vector<16x32xf32> to vector<16xf32>
    %29 = vector.shape_cast %28 : vector<16xf32> to vector<16x1xf32>
    %30 = vector.broadcast %11 : vector<1x1xf32> to vector<16x1xf32>
    %31 = arith.addf %29, %30 : vector<16x1xf32>
    %32 = vector.broadcast %10 : vector<1x32xf32> to vector<16x32xf32>
    %33 = arith.mulf %21, %32 : vector<16x32xf32>
    %cst_22 = arith.constant dense<0.000000e+00> : vector<16xf32>
    %34 = vector.multi_reduction <add>, %33, %cst_22 [1] : vector<16x32xf32> to vector<16xf32>
    %35 = vector.shape_cast %34 : vector<16xf32> to vector<16x1xf32>
    %36 = vector.broadcast %11 : vector<1x1xf32> to vector<16x1xf32>
    %37 = arith.addf %35, %36 : vector<16x1xf32>
    %38 = vector.broadcast %10 : vector<1x32xf32> to vector<16x32xf32>
    %39 = arith.mulf %25, %38 : vector<16x32xf32>
    %cst_23 = arith.constant dense<0.000000e+00> : vector<16xf32>
    %40 = vector.multi_reduction <add>, %39, %cst_23 [1] : vector<16x32xf32> to vector<16xf32>
    %41 = vector.shape_cast %40 : vector<16xf32> to vector<16x1xf32>
    %42 = vector.broadcast %11 : vector<1x1xf32> to vector<16x1xf32>
    %43 = arith.addf %41, %42 : vector<16x1xf32>
    %44 = arith.maximumf %37, %43 : vector<16x1xf32>
    %45 = arith.maximumf %31, %44 : vector<16x1xf32>
    %46 = arith.subf %31, %45 : vector<16x1xf32>
    %47 = math.exp %46 : vector<16x1xf32>
    %48 = arith.subf %37, %45 : vector<16x1xf32>
    %49 = math.exp %48 : vector<16x1xf32>
    %50 = arith.subf %43, %45 : vector<16x1xf32>
    %51 = math.exp %50 : vector<16x1xf32>
    %52 = arith.addf %47, %49 : vector<16x1xf32>
    %53 = arith.addf %52, %51 : vector<16x1xf32>
    %54 = tpu.reciprocal %53 {approx = true} : vector<16x1xf32> -> vector<16x1xf32>
    %55 = arith.mulf %47, %54 : vector<16x1xf32>
    %56 = arith.mulf %49, %54 : vector<16x1xf32>
    %57 = arith.mulf %51, %54 : vector<16x1xf32>
    %58 = vector.broadcast %55 : vector<16x1xf32> to vector<16x32xf32>
    %59 = arith.mulf %58, %17 : vector<16x32xf32>
    %60 = vector.broadcast %56 : vector<16x1xf32> to vector<16x32xf32>
    %61 = arith.mulf %60, %21 : vector<16x32xf32>
    %62 = arith.addf %59, %61 : vector<16x32xf32>
    %63 = vector.broadcast %57 : vector<16x1xf32> to vector<16x32xf32>
    %64 = arith.mulf %63, %25 : vector<16x32xf32>
    %65 = arith.addf %62, %64 : vector<16x32xf32>
    %cst_24 = arith.constant dense<0.000000e+00> : vector<16x32xf32>
    %66 = tpu.matmul %65, %4, %cst_24 {dimension_numbers = #tpu.dot_dimension_numbers<[1], [0], [0], [1], [0, 0, 1, 1], [], []>} : vector<16x32xf32>, vector<32x32xf32>, vector<16x32xf32> -> vector<16x32xf32>
    %67 = vector.broadcast %55 : vector<16x1xf32> to vector<16x32xf32>
    %68 = arith.mulf %67, %66 : vector<16x32xf32>
    %cst_25 = arith.constant dense<0.000000e+00> : vector<16x32xf32>
    %69 = tpu.matmul %1, %68, %cst_25 {dimension_numbers = #tpu.dot_dimension_numbers<[1], [0], [0], [1], [0, 0, 1, 1], [], []>} : vector<16x16xf32>, vector<16x32xf32>, vector<16x32xf32> -> vector<16x32xf32>
    %70 = vector.broadcast %56 : vector<16x1xf32> to vector<16x32xf32>
    %71 = arith.mulf %70, %66 : vector<16x32xf32>
    %cst_26 = arith.constant dense<0.000000e+00> : vector<16x32xf32>
    %72 = tpu.matmul %2, %71, %cst_26 {dimension_numbers = #tpu.dot_dimension_numbers<[1], [0], [0], [1], [0, 0, 1, 1], [], []>} : vector<16x16xf32>, vector<16x32xf32>, vector<16x32xf32> -> vector<16x32xf32>
    %73 = arith.addf %69, %72 : vector<16x32xf32>
    %74 = vector.broadcast %57 : vector<16x1xf32> to vector<16x32xf32>
    %75 = arith.mulf %74, %66 : vector<16x32xf32>
    %cst_27 = arith.constant dense<0.000000e+00> : vector<16x32xf32>
    %76 = tpu.matmul %3, %75, %cst_27 {dimension_numbers = #tpu.dot_dimension_numbers<[1], [0], [0], [1], [0, 0, 1, 1], [], []>} : vector<16x16xf32>, vector<16x32xf32>, vector<16x32xf32> -> vector<16x32xf32>
    %77 = arith.addf %73, %76 : vector<16x32xf32>
    %78 = vector.broadcast %9 : vector<1x32xf32> to vector<16x32xf32>
    %79 = arith.addf %77, %78 : vector<16x32xf32>
    %80 = arith.mulf %79, %79 : vector<16x32xf32>
    %cst_28 = arith.constant dense<0.000000e+00> : vector<16xf32>
    %81 = vector.multi_reduction <add>, %80, %cst_28 [1] : vector<16x32xf32> to vector<16xf32>
    %82 = vector.shape_cast %81 : vector<16xf32> to vector<16x1xf32>
    %83 = arith.mulf %5, %5 : vector<8x32xf32>
    %cst_29 = arith.constant dense<0.000000e+00> : vector<8xf32>
    %84 = vector.multi_reduction <add>, %83, %cst_29 [1] : vector<8x32xf32> to vector<8xf32>
    %85 = vector.shape_cast %84 : vector<8xf32> to vector<1x8xf32>
    "tpu.trace_start"() <{level = 10 : i32, message = "nh,kh->nk"}> : () -> ()
    %cst_30 = arith.constant dense<0.000000e+00> : vector<16x8xf32>
    %86 = tpu.matmul %79, %5, %cst_30 {dimension_numbers = #tpu.dot_dimension_numbers<[1], [1], [0], [0], [0, 0, 1, 0], [], []>} : vector<16x32xf32>, vector<8x32xf32>, vector<16x8xf32> -> vector<16x8xf32>
    "tpu.trace_stop"() : () -> ()
    %87 = vector.broadcast %82 : vector<16x1xf32> to vector<16x8xf32>
    %88 = vector.broadcast %85 : vector<1x8xf32> to vector<16x8xf32>
    %89 = arith.addf %87, %88 : vector<16x8xf32>
    %cst_31 = arith.constant 2.000000e+00 : f32
    %90 = vector.broadcast %cst_31 : f32 to vector<16x8xf32>
    %91 = arith.mulf %90, %86 : vector<16x8xf32>
    %92 = arith.subf %89, %91 : vector<16x8xf32>
    %cst_32 = arith.constant 0.000000e+00 : f32
    %93 = vector.broadcast %cst_32 : f32 to vector<16x8xf32>
    %94 = arith.maximumf %92, %93 : vector<16x8xf32>
    %cst_33 = arith.constant 2.000000e-01 : f32
    %95 = vector.broadcast %cst_33 : f32 to vector<16x8xf32>
    %96 = arith.divf %94, %95 : vector<16x8xf32>
    %cst_34 = arith.constant 1.000000e+00 : f32
    %97 = vector.broadcast %cst_34 : f32 to vector<16x8xf32>
    %98 = arith.addf %97, %96 : vector<16x8xf32>
    %cst_35 = arith.constant 9.99999993E-9 : f32
    %99 = vector.broadcast %cst_35 : f32 to vector<16x8xf32>
    %100 = arith.addf %98, %99 : vector<16x8xf32>
    %cst_36 = arith.constant 1.000000e+00 : f32
    %101 = vector.broadcast %cst_36 : f32 to vector<16x8xf32>
    %102 = arith.divf %101, %100 : vector<16x8xf32>
    %cst_37 = arith.constant 1.200000e+00 : f32
    %103 = vector.broadcast %cst_37 : f32 to vector<16x8xf32>
    %104 = math.powf %102, %103 : vector<16x8xf32>
    %cst_38 = arith.constant 2.000000e+00 : f32
    %105 = vector.broadcast %cst_38 : f32 to vector<16x8xf32>
    %106 = arith.divf %104, %105 : vector<16x8xf32>
    %cst_39 = arith.constant dense<0.000000e+00> : vector<16xf32>
    %107 = vector.multi_reduction <add>, %106, %cst_39 [1] : vector<16x8xf32> to vector<16xf32>
    %108 = vector.shape_cast %107 : vector<16xf32> to vector<16x1xf32>
    %109 = vector.broadcast %108 : vector<16x1xf32> to vector<16x8xf32>
    %110 = arith.divf %106, %109 : vector<16x8xf32>
    %111 = tpu.concatenate %79, %65, %110 in 1 : vector<16x32xf32>, vector<16x32xf32>, vector<16x8xf32> -> vector<16x72xf32>
    %c0_40 = arith.constant 0 : index
    %c0_41 = arith.constant 0 : index
    %112 = vector.load %arg6[%c0_40, %c0_41] : memref<16x72xf32, #tpu.memory_space<vmem>>, vector<16x72xf32>
    tpu.vector_store %arg6[%c0_40, %c0_41], %111 {strides = array<i32>} : memref<16x72xf32, #tpu.memory_space<vmem>>, vector<16x72xf32>,
    return
  }
}

</mosaic_0001>

<llo_original>
// kernel: tpu_custom_call.1
$region0: #{tpu_custom_call.1}
  #allocation0 [shape = 'u32[]', space=smem, size = 0x4, offset = 0x4, fixed_abs, tag = 'smem constant byte address 0x4 - core index']
  #allocation1 [shape = 'u32[144,128]{1,0:T(1,128)}', space=vmem, size = 0x12000, scoped, tag = 'internal scratch']
  %s0 = inlined_call_operand.vmem [shape: f32[16,8], index: 0, kind: input, shape index: {}]
  %s1 = inlined_call_operand.vmem [shape: f32[16,16], index: 1, kind: input, shape index: {}]
  %s2 = inlined_call_operand.vmem [shape: f32[16,16], index: 2, kind: input, shape index: {}]
  %s3 = inlined_call_operand.vmem [shape: f32[16,16], index: 3, kind: input, shape index: {}]
  %s4 = inlined_call_operand.vmem [shape: f32[8,96], index: 4, kind: input, shape index: {}]
  %s5 = inlined_call_operand.vmem [shape: f32[46,32], index: 5, kind: input, shape index: {}]
  %s6 = inlined_call_operand.hbm [shape: f32[16,72], index: 6, kind: output, shape index: {}]
  %s7 = sld [smem:[#allocation0]]
  $region34: #{tpu_custom_call.1} parent=0
    _
  %s9 = ssub.s32 1, %s7
  %s10 = scalar_select 0, %s9, %s7
  $region1: #{tpu_custom_call.1} parent=0
    #allocation2 [shape = 'u8[8192]{0}', space=vmem, size = 0x2000, scoped, tag = 'output window, operand 0, single buffered']
    #allocation3 [shape = 's32[1]{0}', space=sflag, size = 0x4, scoped, tag = 'scoped memory for tpu_custom_call.1']
    %11 = vsyncpa [#allocation3], 0
    // Predicated region
    $region2: #{tpu_custom_call.1} parent=1 // pred_check
      _
    $region3: #{tpu_custom_call.1} parent=1 // pred_check_branch
      %13 = sbr.rel (0) target = $region5
    $region4: #{tpu_custom_call.1} parent=1 // pred_region
      _
    $region5: #{tpu_custom_call.1} parent=1 // pred_fallthru
      _
    // Predicated region
    $region6: #{tpu_custom_call.1} parent=1 // pred_check
      _
    $region7: #{tpu_custom_call.1} parent=1 // pred_check_branch
      %15 = sbr.rel (0) target = $region9
    $region8: #{tpu_custom_call.1} parent=1 // pred_region
      _
    $region9: #{tpu_custom_call.1} parent=1 // pred_fallthru
      _
    // Predicated region
    $region10: #{tpu_custom_call.1} parent=1 // pred_check
      _
    $region11: #{tpu_custom_call.1} parent=1 // pred_check_branch
      %17 = sbr.rel (0) target = $region13
    $region12: #{tpu_custom_call.1} parent=1 // pred_region
      _
    $region13: #{tpu_custom_call.1} parent=1 // pred_fallthru
      _
    // Predicated region
    $region14: #{tpu_custom_call.1} parent=1 // pred_check
      _
    $region15: #{tpu_custom_call.1} parent=1 // pred_check_branch
      %19 = sbr.rel (0) target = $region17
    $region16: #{tpu_custom_call.1} parent=1 // pred_region
      _
    $region17: #{tpu_custom_call.1} parent=1 // pred_fallthru
      _
    // Predicated region
    $region18: #{tpu_custom_call.1} parent=1 // pred_check
      _
    $region19: #{tpu_custom_call.1} parent=1 // pred_check_branch
      %21 = sbr.rel (0) target = $region21
    $region20: #{tpu_custom_call.1} parent=1 // pred_region
      _
    $region21: #{tpu_custom_call.1} parent=1 // pred_fallthru
      _
    // Predicated region
    $region22: #{tpu_custom_call.1} parent=1 // pred_check
      _
    $region23: #{tpu_custom_call.1} parent=1 // pred_check_branch
      %23 = sbr.rel (0) target = $region25
    $region24: #{tpu_custom_call.1} parent=1 // pred_region
      _
    $region25: #{tpu_custom_call.1} parent=1 // pred_fallthru
      _
    %v24 = vld [vmem:[%s0] sm:$0xff]
    %v25 = vld [vmem:[%s0 + $0x8] sm:$0xff]
    %v26 = vld [vmem:[%s1] sm:$0xff]
    %v27 = vld [vmem:[%s1 + $0x8] sm:$0xff]
    %v28 = vld [vmem:[%s2] sm:$0xff]
    %v29 = vld [vmem:[%s2 + $0x8] sm:$0xff]
    %v30 = vld [vmem:[%s3] sm:$0xff]
    %v31 = vld [vmem:[%s3 + $0x8] sm:$0xff]
    %v32 = vld [vmem:[%s5] sm:$0xff]
    %v33 = vld [vmem:[%s5 + $0x8] sm:$0xff]
    %v34 = vld [vmem:[%s5 + $0x10] sm:$0xff]
    %v35 = vld [vmem:[%s5 + $0x18] sm:$0xff]
    %v36 = vld [vmem:[%s5 + $0x20] sm:$0xff]
    %v37 = vld [vmem:[%s5 + $0x28] sm:$0x1]
    %v38 = vld [vmem:[%s5 + $0x29] sm:$0x1]
    %v39 = vld [vmem:[%s5 + $0x2a] sm:$0x1]
    %v40 = vld [vmem:[%s5 + $0x2b] sm:$0x1]
    %v41 = vld [vmem:[%s5 + $0x2c] sm:$0x1]
    %v42 = vld [vmem:[%s5 + $0x2d] sm:$0x1]
    %v43 = vld [vmem:[%s4] sm:$0xff]
    %vm44 = vcmask 64512
    %v46 = vsel %vm44, %v24, 0
    %v49 = vsel %vm44, %v25, 0
    %51 = vmatprep.subr.mxu0 0.0
    %52 = vmatpush1.msra.mxu0 %v43
    %53 = vmatprep.subr.mxu0 0.0
    %54 = vmatpush1.msra.mxu0 0.0
    %55 = vmatprep.subr.mxu0 0.0
    %56 = vmatpush1.msra.mxu0 0.0
    %57 = vmatprep.subr.mxu0 0.0
    %58 = vmatpush1.msra.mxu0 0.0
    %59 = vmatprep.subr.mxu0 0.0
    %60 = vmatpush1.msra.mxu0 0.0
    %61 = vmatprep.subr.mxu0 0.0
    %62 = vmatpush1.msra.mxu0 0.0
    %63 = vmatprep.subr.mxu0 0.0
    %64 = vmatpush1.msra.mxu0 0.0
    %65 = vmatprep.subr.mxu0 0.0
    %66 = vmatpush1.msra.mxu0 0.0
    %67 = vmatprep.subr.mxu0 0.0
    %68 = vmatpush1.msra.mxu0 0.0
    %69 = vmatprep.subr.mxu0 0.0
    %70 = vmatpush1.msra.mxu0 0.0
    %71 = vmatprep.subr.mxu0 0.0
    %72 = vmatpush1.msra.mxu0 0.0
    %73 = vmatprep.subr.mxu0 0.0
    %74 = vmatpush1.msra.mxu0 0.0
    %75 = vmatprep.subr.mxu0 0.0
    %76 = vmatpush1.msra.mxu0 0.0
    %77 = vmatprep.subr.mxu0 0.0
    %78 = vmatpush1.msra.mxu0 0.0
    %79 = vmatprep.subr.mxu0 0.0
    %80 = vmatpush1.msra.mxu0 0.0
    %81 = vmatprep.subr.mxu0 0.0
    %82 = vmatpush1.msra.mxu0 0.0
    %83 = vmatprep.subr.mxu0 0.0
    %84 = vmatpush1.msra.mxu0 0.0
    %85 = vmatprep.subr.mxu0 0.0
    %86 = vmatpush1.msra.mxu0 0.0
    %87 = vmatprep.subr.mxu0 0.0
    %88 = vmatpush1.msra.mxu0 0.0
    %89 = vmatprep.subr.mxu0 0.0
    %90 = vmatpush1.msra.mxu0 0.0
    %91 = vmatprep.subr.mxu0 0.0
    %92 = vmatpush1.msra.mxu0 0.0
    %93 = vmatprep.subr.mxu0 0.0
    %94 = vmatpush1.msra.mxu0 0.0
    %95 = vmatprep.subr.mxu0 0.0
    %96 = vmatpush1.msra.mxu0 0.0
    %97 = vmatprep.subr.mxu0 0.0
    %98 = vmatpush1.msra.mxu0 0.0
    %99 = vmatprep.subr.mxu0 0.0
    %100 = vmatpush1.msra.mxu0 0.0
    %101 = vmatprep.subr.mxu0 0.0
    %102 = vmatpush1.msra.mxu0 0.0
    %103 = vmatprep.subr.mxu0 0.0
    %104 = vmatpush1.msra.mxu0 0.0
    %105 = vmatprep.subr.mxu0 0.0
    %106 = vmatpush1.msra.mxu0 0.0
    %107 = vmatprep.subr.mxu0 0.0
    %108 = vmatpush1.msra.mxu0 0.0
    %109 = vmatprep.subr.mxu0 0.0
    %110 = vmatpush1.msra.mxu0 0.0
    %111 = vmatprep.subr.mxu0 0.0
    %112 = vmatpush1.msra.mxu0 0.0
    %113 = vmatprep.subr.mxu0 0.0
    %114 = vmatpush1.msra.mxu0 0.0
    %115 = vmatprep.mubr.f32.mxu0 0.0
    %116 = vmatmul.mubr.f32.gmra.mrb[0].mxu0 %v46
    %v117 = vpop.f32.mrb[0].mxu0
    %v118 = vadd.f32 0.0, %v117
    %v119 = vpop.f32.mrb[0].mxu0
    %120 = vmatprep.mubr.f32.mxu0 0.0
    %121 = vmatmul.mubr.f32.gmra.mrb[0].mxu0 %v49
    %v122 = vpop.f32.mrb[0].mxu0
    %v123 = vadd.f32 0.0, %v122
    %v124 = vpop.f32.mrb[0].mxu0
    %125 = vdwg.mxu0
    %v126 = vlaneseq
    %v127 = vshrl.u32 %v126, 7
    %v128 = vsub.s32 0, %v127
    %v129 = vrot.slane %v37, %v128
    %vm130 = vcmask 130048
    %v132 = vsel %vm130, %v26, 0
    %v135 = vsel %vm130, %v27, 0
    %137 = vmatprep.subr.mxu0 0.0
    %138 = vmatpush1.msra.mxu0 %v118
    %139 = vmatprep.subr.mxu0 0.0
    %140 = vmatpush1.msra.mxu0 %v123
    %141 = vmatprep.subr.mxu0 0.0
    %142 = vmatpush1.msra.mxu0 0.0
    %143 = vmatprep.subr.mxu0 0.0
    %144 = vmatpush1.msra.mxu0 0.0
    %145 = vmatprep.subr.mxu0 0.0
    %146 = vmatpush1.msra.mxu0 0.0
    %147 = vmatprep.subr.mxu0 0.0
    %148 = vmatpush1.msra.mxu0 0.0
    %149 = vmatprep.subr.mxu0 0.0
    %150 = vmatpush1.msra.mxu0 0.0
    %151 = vmatprep.subr.mxu0 0.0
    %152 = vmatpush1.msra.mxu0 0.0
    %153 = vmatprep.subr.mxu0 0.0
    %154 = vmatpush1.msra.mxu0 0.0
    %155 = vmatprep.subr.mxu0 0.0
    %156 = vmatpush1.msra.mxu0 0.0
    %157 = vmatprep.subr.mxu0 0.0
    %158 = vmatpush1.msra.mxu0 0.0
    %159 = vmatprep.subr.mxu0 0.0
    %160 = vmatpush1.msra.mxu0 0.0
    %161 = vmatprep.subr.mxu0 0.0
    %162 = vmatpush1.msra.mxu0 0.0
    %163 = vmatprep.subr.mxu0 0.0
    %164 = vmatpush1.msra.mxu0 0.0
    %165 = vmatprep.subr.mxu0 0.0
    %166 = vmatpush1.msra.mxu0 0.0
    %167 = vmatprep.subr.mxu0 0.0
    %168 = vmatpush1.msra.mxu0 0.0
    %169 = vmatprep.subr.mxu0 0.0
    %170 = vmatpush1.msra.mxu0 0.0
    %171 = vmatprep.subr.mxu0 0.0
    %172 = vmatpush1.msra.mxu0 0.0
    %173 = vmatprep.subr.mxu0 0.0
    %174 = vmatpush1.msra.mxu0 0.0
    %175 = vmatprep.subr.mxu0 0.0
    %176 = vmatpush1.msra.mxu0 0.0
    %177 = vmatprep.subr.mxu0 0.0
    %178 = vmatpush1.msra.mxu0 0.0
    %179 = vmatprep.subr.mxu0 0.0
    %180 = vmatpush1.msra.mxu0 0.0
    %181 = vmatprep.subr.mxu0 0.0
    %182 = vmatpush1.msra.mxu0 0.0
    %183 = vmatprep.subr.mxu0 0.0
    %184 = vmatpush1.msra.mxu0 0.0
    %185 = vmatprep.subr.mxu0 0.0
    %186 = vmatpush1.msra.mxu0 0.0
    %187 = vmatprep.subr.mxu0 0.0
    %188 = vmatpush1.msra.mxu0 0.0
    %189 = vmatprep.subr.mxu0 0.0
    %190 = vmatpush1.msra.mxu0 0.0
    %191 = vmatprep.subr.mxu0 0.0
    %192 = vmatpush1.msra.mxu0 0.0
    %193 = vmatprep.subr.mxu0 0.0
    %194 = vmatpush1.msra.mxu0 0.0
    %195 = vmatprep.subr.mxu0 0.0
    %196 = vmatpush1.msra.mxu0 0.0
    %197 = vmatprep.subr.mxu0 0.0
    %198 = vmatpush1.msra.mxu0 0.0
    %199 = vmatprep.subr.mxu0 0.0
    %200 = vmatpush1.msra.mxu0 0.0
    %201 = vmatprep.mubr.f32.mxu0 0.0
    %202 = vmatmul.mubr.f32.gmra.mrb[0].mxu0 %v132
    %v203 = vpop.f32.mrb[0].mxu0
    %v204 = vadd.f32 %v129, %v203
    %v205 = vpop.f32.mrb[0].mxu0
    %206 = vmatprep.mubr.f32.mxu0 0.0
    %207 = vmatmul.mubr.f32.gmra.mrb[0].mxu0 %v135
    %v208 = vpop.f32.mrb[0].mxu0
    %v209 = vadd.f32 %v129, %v208
    %v210 = vpop.f32.mrb[0].mxu0
    %211 = vdwg.mxu0
    %v212 = vlaneseq
    %v213 = vshrl.u32 %v212, 7
    %v214 = vsub.s32 0, %v213
    %v215 = vrot.slane %v38, %v214
    %218 = vrot.lane.b32.xlu0 %v118, 96
    %v219 = vpop.permute.xlu0 %218
    %220 = vrot.lane.b32.xlu0 %v123, 96
    %v221 = vpop.permute.xlu0 %220
    %v225 = vsel %vm130, %v28, 0
    %v228 = vsel %vm130, %v29, 0
    %230 = vmatprep.subr.mxu0 0.0
    %231 = vmatpush1.msra.mxu0 %v219
    %232 = vmatprep.subr.mxu0 0.0
    %233 = vmatpush1.msra.mxu0 %v221
    %234 = vmatprep.subr.mxu0 0.0
    %235 = vmatpush1.msra.mxu0 0.0
    %236 = vmatprep.subr.mxu0 0.0
    %237 = vmatpush1.msra.mxu0 0.0
    %238 = vmatprep.subr.mxu0 0.0
    %239 = vmatpush1.msra.mxu0 0.0
    %240 = vmatprep.subr.mxu0 0.0
    %241 = vmatpush1.msra.mxu0 0.0
    %242 = vmatprep.subr.mxu0 0.0
    %243 = vmatpush1.msra.mxu0 0.0
    %244 = vmatprep.subr.mxu0 0.0
    %245 = vmatpush1.msra.mxu0 0.0
    %246 = vmatprep.subr.mxu0 0.0
    %247 = vmatpush1.msra.mxu0 0.0
    %248 = vmatprep.subr.mxu0 0.0
    %249 = vmatpush1.msra.mxu0 0.0
    %250 = vmatprep.subr.mxu0 0.0
    %251 = vmatpush1.msra.mxu0 0.0
    %252 = vmatprep.subr.mxu0 0.0
    %253 = vmatpush1.msra.mxu0 0.0
    %254 = vmatprep.subr.mxu0 0.0
    %255 = vmatpush1.msra.mxu0 0.0
    %256 = vmatprep.subr.mxu0 0.0
    %257 = vmatpush1.msra.mxu0 0.0
    %258 = vmatprep.subr.mxu0 0.0
    %259 = vmatpush1.msra.mxu0 0.0
    %260 = vmatprep.subr.mxu0 0.0
    %261 = vmatpush1.msra.mxu0 0.0
    %262 = vmatprep.subr.mxu0 0.0
    %263 = vmatpush1.msra.mxu0 0.0
    %264 = vmatprep.subr.mxu0 0.0
    %265 = vmatpush1.msra.mxu0 0.0
    %266 = vmatprep.subr.mxu0 0.0
    %267 = vmatpush1.msra.mxu0 0.0
    %268 = vmatprep.subr.mxu0 0.0
    %269 = vmatpush1.msra.mxu0 0.0
    %270 = vmatprep.subr.mxu0 0.0
    %271 = vmatpush1.msra.mxu0 0.0
    %272 = vmatprep.subr.mxu0 0.0
    %273 = vmatpush1.msra.mxu0 0.0
    %274 = vmatprep.subr.mxu0 0.0
    %275 = vmatpush1.msra.mxu0 0.0
    %276 = vmatprep.subr.mxu0 0.0
    %277 = vmatpush1.msra.mxu0 0.0
    %278 = vmatprep.subr.mxu0 0.0
    %279 = vmatpush1.msra.mxu0 0.0
    %280 = vmatprep.subr.mxu0 0.0
    %281 = vmatpush1.msra.mxu0 0.0
    %282 = vmatprep.subr.mxu0 0.0
    %283 = vmatpush1.msra.mxu0 0.0
    %284 = vmatprep.subr.mxu0 0.0
    %285 = vmatpush1.msra.mxu0 0.0
    %286 = vmatprep.subr.mxu0 0.0
    %287 = vmatpush1.msra.mxu0 0.0
    %288 = vmatprep.subr.mxu0 0.0
    %289 = vmatpush1.msra.mxu0 0.0
    %290 = vmatprep.subr.mxu0 0.0
    %291 = vmatpush1.msra.mxu0 0.0
    %292 = vmatprep.subr.mxu0 0.0
    %293 = vmatpush1.msra.mxu0 0.0
    %294 = vmatprep.mubr.f32.mxu0 0.0
    %295 = vmatmul.mubr.f32.gmra.mrb[0].mxu0 %v225
    %v296 = vpop.f32.mrb[0].mxu0
    %v297 = vadd.f32 %v215, %v296
    %v298 = vpop.f32.mrb[0].mxu0
    %299 = vmatprep.mubr.f32.mxu0 0.0
    %300 = vmatmul.mubr.f32.gmra.mrb[0].mxu0 %v228
    %v301 = vpop.f32.mrb[0].mxu0
    %v302 = vadd.f32 %v215, %v301
    %v303 = vpop.f32.mrb[0].mxu0
    %304 = vdwg.mxu0
    %v305 = vlaneseq
    %v306 = vshrl.u32 %v305, 7
    %v307 = vsub.s32 0, %v306
    %v308 = vrot.slane %v39, %v307
    %309 = vrot.lane.b32.xlu0 %v118, 64
    %v310 = vpop.permute.xlu0 %309
    %311 = vrot.lane.b32.xlu0 %v123, 64
    %v312 = vpop.permute.xlu0 %311
    %v316 = vsel %vm130, %v30, 0
    %v319 = vsel %vm130, %v31, 0
    %321 = vmatprep.subr.mxu0 0.0
    %322 = vmatpush1.msra.mxu0 %v310
    %323 = vmatprep.subr.mxu0 0.0
    %324 = vmatpush1.msra.mxu0 %v312
    %325 = vmatprep.subr.mxu0 0.0
    %326 = vmatpush1.msra.mxu0 0.0
    %327 = vmatprep.subr.mxu0 0.0
    %328 = vmatpush1.msra.mxu0 0.0
    %329 = vmatprep.subr.mxu0 0.0
    %330 = vmatpush1.msra.mxu0 0.0
    %331 = vmatprep.subr.mxu0 0.0
    %332 = vmatpush1.msra.mxu0 0.0
    %333 = vmatprep.subr.mxu0 0.0
    %334 = vmatpush1.msra.mxu0 0.0
    %335 = vmatprep.subr.mxu0 0.0
    %336 = vmatpush1.msra.mxu0 0.0
    %337 = vmatprep.subr.mxu0 0.0
    %338 = vmatpush1.msra.mxu0 0.0
    %339 = vmatprep.subr.mxu0 0.0
    %340 = vmatpush1.msra.mxu0 0.0
    %341 = vmatprep.subr.mxu0 0.0
    %342 = vmatpush1.msra.mxu0 0.0
    %343 = vmatprep.subr.mxu0 0.0
    %344 = vmatpush1.msra.mxu0 0.0
    %345 = vmatprep.subr.mxu0 0.0
    %346 = vmatpush1.msra.mxu0 0.0
    %347 = vmatprep.subr.mxu0 0.0
    %348 = vmatpush1.msra.mxu0 0.0
    %349 = vmatprep.subr.mxu0 0.0
    %350 = vmatpush1.msra.mxu0 0.0
    %351 = vmatprep.subr.mxu0 0.0
    %352 = vmatpush1.msra.mxu0 0.0
    %353 = vmatprep.subr.mxu0 0.0
    %354 = vmatpush1.msra.mxu0 0.0
    %355 = vmatprep.subr.mxu0 0.0
    %356 = vmatpush1.msra.mxu0 0.0
    %357 = vmatprep.subr.mxu0 0.0
    %358 = vmatpush1.msra.mxu0 0.0
    %359 = vmatprep.subr.mxu0 0.0
    %360 = vmatpush1.msra.mxu0 0.0
    %361 = vmatprep.subr.mxu0 0.0
    %362 = vmatpush1.msra.mxu0 0.0
    %363 = vmatprep.subr.mxu0 0.0
    %364 = vmatpush1.msra.mxu0 0.0
    %365 = vmatprep.subr.mxu0 0.0
    %366 = vmatpush1.msra.mxu0 0.0
    %367 = vmatprep.subr.mxu0 0.0
    %368 = vmatpush1.msra.mxu0 0.0
    %369 = vmatprep.subr.mxu0 0.0
    %370 = vmatpush1.msra.mxu0 0.0
    %371 = vmatprep.subr.mxu0 0.0
    %372 = vmatpush1.msra.mxu0 0.0
    %373 = vmatprep.subr.mxu0 0.0
    %374 = vmatpush1.msra.mxu0 0.0
    %375 = vmatprep.subr.mxu0 0.0
    %376 = vmatpush1.msra.mxu0 0.0
    %377 = vmatprep.subr.mxu0 0.0
    %378 = vmatpush1.msra.mxu0 0.0
    %379 = vmatprep.subr.mxu0 0.0
    %380 = vmatpush1.msra.mxu0 0.0
    %381 = vmatprep.subr.mxu0 0.0
    %382 = vmatpush1.msra.mxu0 0.0
    %383 = vmatprep.subr.mxu0 0.0
    %384 = vmatpush1.msra.mxu0 0.0
    %385 = vmatprep.mubr.f32.mxu0 0.0
    %386 = vmatmul.mubr.f32.gmra.mrb[0].mxu0 %v316
    %v387 = vpop.f32.mrb[0].mxu0
    %v388 = vadd.f32 %v308, %v387
    %v389 = vpop.f32.mrb[0].mxu0
    %390 = vmatprep.mubr.f32.mxu0 0.0
    %391 = vmatmul.mubr.f32.gmra.mrb[0].mxu0 %v319
    %v392 = vpop.f32.mrb[0].mxu0
    %v393 = vadd.f32 %v308, %v392
    %v394 = vpop.f32.mrb[0].mxu0
    %395 = vdwg.mxu0
    %v396 = vlaneseq
    %v397 = vshrl.u32 %v396, 7
    %v398 = vsub.s32 0, %v397
    %v399 = vrot.slane %v41, %v398
    %v400 = vmul.f32 %v204, %v399
    %v401 = vmul.f32 %v209, %v399
    %vm402 = vcmask 261120
    %v403 = vsel %vm402, %v400, 0.0
    %404 = vadd.xlane.f32.xlu0 %v403
    %v405 = vpop.xlane.xlu0 %404
    %v406 = vsel %vm402, %v401, 0.0
    %407 = vadd.xlane.f32.xlu0 %v406
    %v408 = vpop.xlane.xlu0 %407
    %v409 = vlaneseq
    %v410 = vshrl.u32 %v409, 7
    %v411 = vsub.s32 0, %v410
    %v412 = vrot.slane %v42, %v411
    %v413 = vadd.f32 %v405, %v412
    %v414 = vadd.f32 %v408, %v412
    %v415 = vmul.f32 %v297, %v399
    %v416 = vmul.f32 %v302, %v399
    %v417 = vsel %vm402, %v415, 0.0
    %418 = vadd.xlane.f32.xlu0 %v417
    %v419 = vpop.xlane.xlu0 %418
    %v420 = vsel %vm402, %v416, 0.0
    %421 = vadd.xlane.f32.xlu0 %v420
    %v422 = vpop.xlane.xlu0 %421
    %v423 = vadd.f32 %v419, %v412
    %v424 = vadd.f32 %v422, %v412
    %v425 = vmul.f32 %v388, %v399
    %v426 = vmul.f32 %v393, %v399
    %v427 = vsel %vm402, %v425, 0.0
    %428 = vadd.xlane.f32.xlu0 %v427
    %v429 = vpop.xlane.xlu0 %428
    %v430 = vsel %vm402, %v426, 0.0
    %431 = vadd.xlane.f32.xlu0 %v430
    %v432 = vpop.xlane.xlu0 %431
    %v433 = vadd.f32 %v429, %v412
    %v434 = vadd.f32 %v432, %v412
    %v435 = vmax.f32 %v423, %v433
    %v436 = vmax.f32 %v424, %v434
    %v437 = vmax.f32 %v413, %v435
    %v438 = vmax.f32 %v414, %v436
    %v439 = vsub.f32 %v413, %v437
    %v440 = vsub.f32 %v414, %v438
    %v441 = vmul.f32 %v439, 1.442695
    %v442 = vpow.pop %v441
    %v443 = vmul.f32 %v440, 1.442695
    %v444 = vpow.pop %v443
    %v445 = vsub.f32 %v423, %v437
    %v446 = vsub.f32 %v424, %v438
    %v447 = vmul.f32 %v445, 1.442695
    %v448 = vpow.pop %v447
    %v449 = vmul.f32 %v446, 1.442695
    %v450 = vpow.pop %v449
    %v451 = vsub.f32 %v433, %v437
    %v452 = vsub.f32 %v434, %v438
    %v453 = vmul.f32 %v451, 1.442695
    %v454 = vpow.pop %v453
    %v455 = vmul.f32 %v452, 1.442695
    %v456 = vpow.pop %v455
    %v457 = vadd.f32 %v442, %v448
    %v458 = vadd.f32 %v444, %v450
    %v459 = vadd.f32 %v457, %v454
    %v460 = vadd.f32 %v458, %v456
    %v461 = vrcp.pop %v459
    %v462 = vrcp.pop %v460
    %v463 = vmul.f32 %v442, %v461
    %v464 = vmul.f32 %v444, %v462
    %v465 = vmul.f32 %v448, %v461
    %v466 = vmul.f32 %v450, %v462
    %v467 = vmul.f32 %v454, %v461
    %v468 = vmul.f32 %v456, %v462
    %470 = vset.pattern.permute.xlu0 0
    %471 = vperm.xlu0 %470, %v463
    %v472 = vpop.permute.xlu0 %471
    %475 = vset.pattern.permute.xlu0 0
    %476 = vperm.xlu0 %475, %v464
    %v477 = vpop.permute.xlu0 %476
    %v479 = vmul.f32 %v472, %v204
    %v480 = vmul.f32 %v477, %v209
    %482 = vset.pattern.permute.xlu0 0
    %483 = vperm.xlu0 %482, %v465
    %v484 = vpop.permute.xlu0 %483
    %487 = vset.pattern.permute.xlu0 0
    %488 = vperm.xlu0 %487, %v466
    %v489 = vpop.permute.xlu0 %488
    %v491 = vmul.f32 %v484, %v297
    %v492 = vmul.f32 %v489, %v302
    %v493 = vadd.f32 %v479, %v491
    %v494 = vadd.f32 %v480, %v492
    %496 = vset.pattern.permute.xlu0 0
    %497 = vperm.xlu0 %496, %v467
    %v498 = vpop.permute.xlu0 %497
    %501 = vset.pattern.permute.xlu0 0
    %502 = vperm.xlu0 %501, %v468
    %v503 = vpop.permute.xlu0 %502
    %v505 = vmul.f32 %v498, %v388
    %v506 = vmul.f32 %v503, %v393
    %v507 = vadd.f32 %v493, %v505
    %v508 = vadd.f32 %v494, %v506
    %v510 = vsel %vm402, %v507, 0
    %v513 = vsel %vm402, %v508, 0
    %515 = vmatprep.subr.mxu0 0.0
    %516 = vmatpush1.msra.mxu0 %v32
    %517 = vmatprep.subr.mxu0 0.0
    %518 = vmatpush1.msra.mxu0 %v33
    %519 = vmatprep.subr.mxu0 0.0
    %520 = vmatpush1.msra.mxu0 %v34
    %521 = vmatprep.subr.mxu0 0.0
    %522 = vmatpush1.msra.mxu0 %v35
    %523 = vmatprep.subr.mxu0 0.0
    %524 = vmatpush1.msra.mxu0 0.0
    %525 = vmatprep.subr.mxu0 0.0
    %526 = vmatpush1.msra.mxu0 0.0
    %527 = vmatprep.subr.mxu0 0.0
    %528 = vmatpush1.msra.mxu0 0.0
    %529 = vmatprep.subr.mxu0 0.0
    %530 = vmatpush1.msra.mxu0 0.0
    %531 = vmatprep.subr.mxu0 0.0
    %532 = vmatpush1.msra.mxu0 0.0
    %533 = vmatprep.subr.mxu0 0.0
    %534 = vmatpush1.msra.mxu0 0.0
    %535 = vmatprep.subr.mxu0 0.0
    %536 = vmatpush1.msra.mxu0 0.0
    %537 = vmatprep.subr.mxu0 0.0
    %538 = vmatpush1.msra.mxu0 0.0
    %539 = vmatprep.subr.mxu0 0.0
    %540 = vmatpush1.msra.mxu0 0.0
    %541 = vmatprep.subr.mxu0 0.0
    %542 = vmatpush1.msra.mxu0 0.0
    %543 = vmatprep.subr.mxu0 0.0
    %544 = vmatpush1.msra.mxu0 0.0
    %545 = vmatprep.subr.mxu0 0.0
    %546 = vmatpush1.msra.mxu0 0.0
    %547 = vmatprep.subr.mxu0 0.0
    %548 = vmatpush1.msra.mxu0 0.0
    %549 = vmatprep.subr.mxu0 0.0
    %550 = vmatpush1.msra.mxu0 0.0
    %551 = vmatprep.subr.mxu0 0.0
    %552 = vmatpush1.msra.mxu0 0.0
    %553 = vmatprep.subr.mxu0 0.0
    %554 = vmatpush1.msra.mxu0 0.0
    %555 = vmatprep.subr.mxu0 0.0
    %556 = vmatpush1.msra.mxu0 0.0
    %557 = vmatprep.subr.mxu0 0.0
    %558 = vmatpush1.msra.mxu0 0.0
    %559 = vmatprep.subr.mxu0 0.0
    %560 = vmatpush1.msra.mxu0 0.0
    %561 = vmatprep.subr.mxu0 0.0
    %562 = vmatpush1.msra.mxu0 0.0
    %563 = vmatprep.subr.mxu0 0.0
    %564 = vmatpush1.msra.mxu0 0.0
    %565 = vmatprep.subr.mxu0 0.0
    %566 = vmatpush1.msra.mxu0 0.0
    %567 = vmatprep.subr.mxu0 0.0
    %568 = vmatpush1.msra.mxu0 0.0
    %569 = vmatprep.subr.mxu0 0.0
    %570 = vmatpush1.msra.mxu0 0.0
    %571 = vmatprep.subr.mxu0 0.0
    %572 = vmatpush1.msra.mxu0 0.0
    %573 = vmatprep.subr.mxu0 0.0
    %574 = vmatpush1.msra.mxu0 0.0
    %575 = vmatprep.subr.mxu0 0.0
    %576 = vmatpush1.msra.mxu0 0.0
    %577 = vmatprep.subr.mxu0 0.0
    %578 = vmatpush1.msra.mxu0 0.0
    %579 = vmatprep.mubr.f32.mxu0 0.0
    %580 = vmatmul.mubr.f32.gmra.mrb[0].mxu0 %v510
    %v581 = vpop.f32.mrb[0].mxu0
    %v582 = vadd.f32 0.0, %v581
    %v583 = vpop.f32.mrb[0].mxu0
    %584 = vmatprep.mubr.f32.mxu0 0.0
    %585 = vmatmul.mubr.f32.gmra.mrb[0].mxu0 %v513
    %v586 = vpop.f32.mrb[0].mxu0
    %v587 = vadd.f32 0.0, %v586
    %v588 = vpop.f32.mrb[0].mxu0
    %589 = vdwg.mxu0
    %v590 = vmul.f32 %v472, %v582
    %v591 = vmul.f32 %v477, %v587
    %v592 = vmul.f32 %v484, %v582
    %v593 = vmul.f32 %v489, %v587
    %594 = vmatprep.subr.mxu0 0.0
    %595 = vmatpush1.msra.mxu0 %v592
    %596 = vmatprep.subr.mxu0 0.0
    %597 = vmatpush1.msra.mxu0 %v593
    %598 = vmatprep.subr.mxu0 0.0
    %599 = vmatpush1.msra.mxu0 0.0
    %600 = vmatprep.subr.mxu0 0.0
    %601 = vmatpush1.msra.mxu0 0.0
    %602 = vmatprep.subr.mxu0 0.0
    %603 = vmatpush1.msra.mxu0 0.0
    %604 = vmatprep.subr.mxu0 0.0
    %605 = vmatpush1.msra.mxu0 0.0
    %606 = vmatprep.subr.mxu0 0.0
    %607 = vmatpush1.msra.mxu0 0.0
    %608 = vmatprep.subr.mxu0 0.0
    %609 = vmatpush1.msra.mxu0 0.0
    %610 = vmatprep.subr.mxu0 0.0
    %611 = vmatpush1.msra.mxu0 0.0
    %612 = vmatprep.subr.mxu0 0.0
    %613 = vmatpush1.msra.mxu0 0.0
    %614 = vmatprep.subr.mxu0 0.0
    %615 = vmatpush1.msra.mxu0 0.0
    %616 = vmatprep.subr.mxu0 0.0
    %617 = vmatpush1.msra.mxu0 0.0
    %618 = vmatprep.subr.mxu0 0.0
    %619 = vmatpush1.msra.mxu0 0.0
    %620 = vmatprep.subr.mxu0 0.0
    %621 = vmatpush1.msra.mxu0 0.0
    %622 = vmatprep.subr.mxu0 0.0
    %623 = vmatpush1.msra.mxu0 0.0
    %624 = vmatprep.subr.mxu0 0.0
    %625 = vmatpush1.msra.mxu0 0.0
    %626 = vmatprep.subr.mxu0 0.0
    %627 = vmatpush1.msra.mxu0 0.0
    %628 = vmatprep.subr.mxu0 0.0
    %629 = vmatpush1.msra.mxu0 0.0
    %630 = vmatprep.subr.mxu0 0.0
    %631 = vmatpush1.msra.mxu0 0.0
    %632 = vmatprep.subr.mxu0 0.0
    %633 = vmatpush1.msra.mxu0 0.0
    %634 = vmatprep.subr.mxu0 0.0
    %635 = vmatpush1.msra.mxu0 0.0
    %636 = vmatprep.subr.mxu0 0.0
    %637 = vmatpush1.msra.mxu0 0.0
    %638 = vmatprep.subr.mxu0 0.0
    %639 = vmatpush1.msra.mxu0 0.0
    %640 = vmatprep.subr.mxu0 0.0
    %641 = vmatpush1.msra.mxu0 0.0
    %642 = vmatprep.subr.mxu0 0.0
    %643 = vmatpush1.msra.mxu0 0.0
    %644 = vmatprep.subr.mxu0 0.0
    %645 = vmatpush1.msra.mxu0 0.0
    %646 = vmatprep.subr.mxu0 0.0
    %647 = vmatpush1.msra.mxu0 0.0
    %648 = vmatprep.subr.mxu0 0.0
    %649 = vmatpush1.msra.mxu0 0.0
    %650 = vmatprep.subr.mxu0 0.0
    %651 = vmatpush1.msra.mxu0 0.0
    %652 = vmatprep.subr.mxu0 0.0
    %653 = vmatpush1.msra.mxu0 0.0
    %654 = vmatprep.subr.mxu0 0.0
    %655 = vmatpush1.msra.mxu0 0.0
    %656 = vmatprep.subr.mxu0 0.0
    %657 = vmatpush1.msra.mxu0 0.0
    %658 = vmatprep.mubr.f32.mxu0 0.0
    %659 = vmatmul.mubr.f32.gmra.mrb[0].mxu0 %v225
    %v660 = vpop.f32.mrb[0].mxu0
    %v661 = vadd.f32 0.0, %v660
    %v662 = vpop.f32.mrb[0].mxu0
    %663 = vmatprep.mubr.f32.mxu0 0.0
    %664 = vmatmul.mubr.f32.gmra.mrb[0].mxu0 %v228
    %v665 = vpop.f32.mrb[0].mxu0
    %v666 = vadd.f32 0.0, %v665
    %v667 = vpop.f32.mrb[0].mxu0
    %668 = vdwg.mxu0
    %669 = vmatprep.subr.mxu0 0.0
    %670 = vmatpush1.msra.mxu0 %v590
    %671 = vmatprep.subr.mxu0 0.0
    %672 = vmatpush1.msra.mxu0 %v591
    %673 = vmatprep.subr.mxu0 0.0
    %674 = vmatpush1.msra.mxu0 0.0
    %675 = vmatprep.subr.mxu0 0.0
    %676 = vmatpush1.msra.mxu0 0.0
    %677 = vmatprep.subr.mxu0 0.0
    %678 = vmatpush1.msra.mxu0 0.0
    %679 = vmatprep.subr.mxu0 0.0
    %680 = vmatpush1.msra.mxu0 0.0
    %681 = vmatprep.subr.mxu0 0.0
    %682 = vmatpush1.msra.mxu0 0.0
    %683 = vmatprep.subr.mxu0 0.0
    %684 = vmatpush1.msra.mxu0 0.0
    %685 = vmatprep.subr.mxu0 0.0
    %686 = vmatpush1.msra.mxu0 0.0
    %687 = vmatprep.subr.mxu0 0.0
    %688 = vmatpush1.msra.mxu0 0.0
    %689 = vmatprep.subr.mxu0 0.0
    %690 = vmatpush1.msra.mxu0 0.0
    %691 = vmatprep.subr.mxu0 0.0
    %692 = vmatpush1.msra.mxu0 0.0
    %693 = vmatprep.subr.mxu0 0.0
    %694 = vmatpush1.msra.mxu0 0.0
    %695 = vmatprep.subr.mxu0 0.0
    %696 = vmatpush1.msra.mxu0 0.0
    %697 = vmatprep.subr.mxu0 0.0
    %698 = vmatpush1.msra.mxu0 0.0
    %699 = vmatprep.subr.mxu0 0.0
    %700 = vmatpush1.msra.mxu0 0.0
    %701 = vmatprep.subr.mxu0 0.0
    %702 = vmatpush1.msra.mxu0 0.0
    %703 = vmatprep.subr.mxu0 0.0
    %704 = vmatpush1.msra.mxu0 0.0
    %705 = vmatprep.subr.mxu0 0.0
    %706 = vmatpush1.msra.mxu0 0.0
    %707 = vmatprep.subr.mxu0 0.0
    %708 = vmatpush1.msra.mxu0 0.0
    %709 = vmatprep.subr.mxu0 0.0
    %710 = vmatpush1.msra.mxu0 0.0
    %711 = vmatprep.subr.mxu0 0.0
    %712 = vmatpush1.msra.mxu0 0.0
    %713 = vmatprep.subr.mxu0 0.0
    %714 = vmatpush1.msra.mxu0 0.0
    %715 = vmatprep.subr.mxu0 0.0
    %716 = vmatpush1.msra.mxu0 0.0
    %717 = vmatprep.subr.mxu0 0.0
    %718 = vmatpush1.msra.mxu0 0.0
    %719 = vmatprep.subr.mxu0 0.0
    %720 = vmatpush1.msra.mxu0 0.0
    %721 = vmatprep.subr.mxu0 0.0
    %722 = vmatpush1.msra.mxu0 0.0
    %723 = vmatprep.subr.mxu0 0.0
    %724 = vmatpush1.msra.mxu0 0.0
    %725 = vmatprep.subr.mxu0 0.0
    %726 = vmatpush1.msra.mxu0 0.0
    %727 = vmatprep.subr.mxu0 0.0
    %728 = vmatpush1.msra.mxu0 0.0
    %729 = vmatprep.subr.mxu0 0.0
    %730 = vmatpush1.msra.mxu0 0.0
    %731 = vmatprep.subr.mxu0 0.0
    %732 = vmatpush1.msra.mxu0 0.0
    %733 = vmatprep.mubr.f32.mxu0 0.0
    %734 = vmatmul.mubr.f32.gmra.mrb[0].mxu0 %v132
    %v735 = vpop.f32.mrb[0].mxu0
    %v736 = vadd.f32 %v661, %v735
    %v737 = vpop.f32.mrb[0].mxu0
    %738 = vmatprep.mubr.f32.mxu0 0.0
    %739 = vmatmul.mubr.f32.gmra.mrb[0].mxu0 %v135
    %v740 = vpop.f32.mrb[0].mxu0
    %v741 = vadd.f32 %v666, %v740
    %v742 = vpop.f32.mrb[0].mxu0
    %743 = vdwg.mxu0
    %v744 = vmul.f32 %v498, %v582
    %v745 = vmul.f32 %v503, %v587
    %746 = vmatprep.subr.mxu0 0.0
    %747 = vmatpush1.msra.mxu0 %v744
    %748 = vmatprep.subr.mxu0 0.0
    %749 = vmatpush1.msra.mxu0 %v745
    %750 = vmatprep.subr.mxu0 0.0
    %751 = vmatpush1.msra.mxu0 0.0
    %752 = vmatprep.subr.mxu0 0.0
    %753 = vmatpush1.msra.mxu0 0.0
    %754 = vmatprep.subr.mxu0 0.0
    %755 = vmatpush1.msra.mxu0 0.0
    %756 = vmatprep.subr.mxu0 0.0
    %757 = vmatpush1.msra.mxu0 0.0
    %758 = vmatprep.subr.mxu0 0.0
    %759 = vmatpush1.msra.mxu0 0.0
    %760 = vmatprep.subr.mxu0 0.0
    %761 = vmatpush1.msra.mxu0 0.0
    %762 = vmatprep.subr.mxu0 0.0
    %763 = vmatpush1.msra.mxu0 0.0
    %764 = vmatprep.subr.mxu0 0.0
    %765 = vmatpush1.msra.mxu0 0.0
    %766 = vmatprep.subr.mxu0 0.0
    %767 = vmatpush1.msra.mxu0 0.0
    %768 = vmatprep.subr.mxu0 0.0
    %769 = vmatpush1.msra.mxu0 0.0
    %770 = vmatprep.subr.mxu0 0.0
    %771 = vmatpush1.msra.mxu0 0.0
    %772 = vmatprep.subr.mxu0 0.0
    %773 = vmatpush1.msra.mxu0 0.0
    %774 = vmatprep.subr.mxu0 0.0
    %775 = vmatpush1.msra.mxu0 0.0
    %776 = vmatprep.subr.mxu0 0.0
    %777 = vmatpush1.msra.mxu0 0.0
    %778 = vmatprep.subr.mxu0 0.0
    %779 = vmatpush1.msra.mxu0 0.0
    %780 = vmatprep.subr.mxu0 0.0
    %781 = vmatpush1.msra.mxu0 0.0
    %782 = vmatprep.subr.mxu0 0.0
    %783 = vmatpush1.msra.mxu0 0.0
    %784 = vmatprep.subr.mxu0 0.0
    %785 = vmatpush1.msra.mxu0 0.0
    %786 = vmatprep.subr.mxu0 0.0
    %787 = vmatpush1.msra.mxu0 0.0
    %788 = vmatprep.subr.mxu0 0.0
    %789 = vmatpush1.msra.mxu0 0.0
    %790 = vmatprep.subr.mxu0 0.0
    %791 = vmatpush1.msra.mxu0 0.0
    %792 = vmatprep.subr.mxu0 0.0
    %793 = vmatpush1.msra.mxu0 0.0
    %794 = vmatprep.subr.mxu0 0.0
    %795 = vmatpush1.msra.mxu0 0.0
    %796 = vmatprep.subr.mxu0 0.0
    %797 = vmatpush1.msra.mxu0 0.0
    %798 = vmatprep.subr.mxu0 0.0
    %799 = vmatpush1.msra.mxu0 0.0
    %800 = vmatprep.subr.mxu0 0.0
    %801 = vmatpush1.msra.mxu0 0.0
    %802 = vmatprep.subr.mxu0 0.0
    %803 = vmatpush1.msra.mxu0 0.0
    %804 = vmatprep.subr.mxu0 0.0
    %805 = vmatpush1.msra.mxu0 0.0
    %806 = vmatprep.subr.mxu0 0.0
    %807 = vmatpush1.msra.mxu0 0.0
    %808 = vmatprep.subr.mxu0 0.0
    %809 = vmatpush1.msra.mxu0 0.0
    %810 = vmatprep.mubr.f32.mxu0 0.0
    %811 = vmatmul.mubr.f32.gmra.mrb[0].mxu0 %v316
    %v812 = vpop.f32.mrb[0].mxu0
    %v813 = vadd.f32 0.0, %v812
    %v814 = vpop.f32.mrb[0].mxu0
    %815 = vmatprep.mubr.f32.mxu0 0.0
    %816 = vmatmul.mubr.f32.gmra.mrb[0].mxu0 %v319
    %v817 = vpop.f32.mrb[0].mxu0
    %v818 = vadd.f32 0.0, %v817
    %v819 = vpop.f32.mrb[0].mxu0
    %820 = vdwg.mxu0
    %v821 = vadd.f32 %v736, %v813
    %v822 = vadd.f32 %v741, %v818
    %v823 = vlaneseq
    %v824 = vshrl.u32 %v823, 7
    %v825 = vsub.s32 0, %v824
    %v826 = vrot.slane %v40, %v825
    %v827 = vadd.f32 %v821, %v826
    %v828 = vadd.f32 %v822, %v826
    %v829 = vmul.f32 %v827, %v827
    %v830 = vmul.f32 %v828, %v828
    %v831 = vsel %vm402, %v829, 0.0
    %832 = vadd.xlane.f32.xlu0 %v831
    %v833 = vpop.xlane.xlu0 %832
    %v834 = vsel %vm402, %v830, 0.0
    %835 = vadd.xlane.f32.xlu0 %v834
    %v836 = vpop.xlane.xlu0 %835
    %v837 = vmul.f32 %v36, %v36
    %v838 = vsel %vm402, %v837, 0.0
    %839 = vadd.xlane.f32.xlu0 %v838
    %v840 = vpop.xlane.xlu0 %839
    %v842 = vsel %vm402, %v827, 0
    %v845 = vsel %vm402, %v828, 0
    %v848 = vsel %vm402, %v36, 0
    %850 = vmatprep.subr.mxu0 0.0
    %851 = vmatpush1.xpose.msra.mxu0 %v848
    %852 = vmatprep.subr.mxu0 0.0
    %853 = vmatpush1.xpose.msra.mxu0 0.0
    %854 = vmatprep.subr.mxu0 0.0
    %855 = vmatpush1.xpose.msra.mxu0 0.0
    %856 = vmatprep.subr.mxu0 0.0
    %857 = vmatpush1.xpose.msra.mxu0 0.0
    %858 = vmatprep.subr.mxu0 0.0
    %859 = vmatpush1.xpose.msra.mxu0 0.0
    %860 = vmatprep.subr.mxu0 0.0
    %861 = vmatpush1.xpose.msra.mxu0 0.0
    %862 = vmatprep.subr.mxu0 0.0
    %863 = vmatpush1.xpose.msra.mxu0 0.0
    %864 = vmatprep.subr.mxu0 0.0
    %865 = vmatpush1.xpose.msra.mxu0 0.0
    %866 = vmatprep.subr.mxu0 0.0
    %867 = vmatpush1.xpose.msra.mxu0 0.0
    %868 = vmatprep.subr.mxu0 0.0
    %869 = vmatpush1.xpose.msra.mxu0 0.0
    %870 = vmatprep.subr.mxu0 0.0
    %871 = vmatpush1.xpose.msra.mxu0 0.0
    %872 = vmatprep.subr.mxu0 0.0
    %873 = vmatpush1.xpose.msra.mxu0 0.0
    %874 = vmatprep.subr.mxu0 0.0
    %875 = vmatpush1.xpose.msra.mxu0 0.0
    %876 = vmatprep.subr.mxu0 0.0
    %877 = vmatpush1.xpose.msra.mxu0 0.0
    %878 = vmatprep.subr.mxu0 0.0
    %879 = vmatpush1.xpose.msra.mxu0 0.0
    %880 = vmatprep.subr.mxu0 0.0
    %881 = vmatpush1.xpose.msra.mxu0 0.0
    %882 = vmatprep.subr.mxu0 0.0
    %883 = vmatpush1.xpose.msra.mxu0 0.0
    %884 = vmatprep.subr.mxu0 0.0
    %885 = vmatpush1.xpose.msra.mxu0 0.0
    %886 = vmatprep.subr.mxu0 0.0
    %887 = vmatpush1.xpose.msra.mxu0 0.0
    %888 = vmatprep.subr.mxu0 0.0
    %889 = vmatpush1.xpose.msra.mxu0 0.0
    %890 = vmatprep.subr.mxu0 0.0
    %891 = vmatpush1.xpose.msra.mxu0 0.0
    %892 = vmatprep.subr.mxu0 0.0
    %893 = vmatpush1.xpose.msra.mxu0 0.0
    %894 = vmatprep.subr.mxu0 0.0
    %895 = vmatpush1.xpose.msra.mxu0 0.0
    %896 = vmatprep.subr.mxu0 0.0
    %897 = vmatpush1.xpose.msra.mxu0 0.0
    %898 = vmatprep.subr.mxu0 0.0
    %899 = vmatpush1.xpose.msra.mxu0 0.0
    %900 = vmatprep.subr.mxu0 0.0
    %901 = vmatpush1.xpose.msra.mxu0 0.0
    %902 = vmatprep.subr.mxu0 0.0
    %903 = vmatpush1.xpose.msra.mxu0 0.0
    %904 = vmatprep.subr.mxu0 0.0
    %905 = vmatpush1.xpose.msra.mxu0 0.0
    %906 = vmatprep.subr.mxu0 0.0
    %907 = vmatpush1.xpose.msra.mxu0 0.0
    %908 = vmatprep.subr.mxu0 0.0
    %909 = vmatpush1.xpose.msra.mxu0 0.0
    %910 = vmatprep.subr.mxu0 0.0
    %911 = vmatpush1.xpose.msra.mxu0 0.0
    %912 = vmatprep.subr.mxu0 0.0
    %913 = vmatpush1.xpose.msra.mxu0 0.0
    %914 = vmatprep.mubr.f32.mxu0 0.0
    %915 = vmatmul.mubr.f32.gmra.mrb[0].mxu0 %v842
    %v916 = vpop.f32.mrb[0].mxu0
    %v917 = vadd.f32 0.0, %v916
    %v918 = vpop.f32.mrb[0].mxu0
    %919 = vmatprep.mubr.f32.mxu0 0.0
    %920 = vmatmul.mubr.f32.gmra.mrb[0].mxu0 %v845
    %v921 = vpop.f32.mrb[0].mxu0
    %v922 = vadd.f32 0.0, %v921
    %v923 = vpop.f32.mrb[0].mxu0
    %924 = vdwg.mxu0
    %v926 = vlaneseq
    %v927 = vand.u32 %v926, 127
    %v928 = vlaneseq
    %v929 = vshrl.u32 %v928, 7
    %v930 = vsub.s32 %v927, %v929
    %v931 = vrot.slane %v840, %v930
    %vm932 = vcmask 1042434
    %v933 = vsel %vm932, %v931, %v931
    %vm934 = vcmask 1043459
    %v935 = vsel %vm934, %v931, %v933
    %vm936 = vcmask 1044484
    %v937 = vsel %vm936, %v931, %v935
    %vm938 = vcmask 1045509
    %v939 = vsel %vm938, %v931, %v937
    %vm940 = vcmask 1046534
    %v941 = vsel %vm940, %v931, %v939
    %vm942 = vcmask 1047559
    %v943 = vsel %vm942, %v931, %v941
    %v945 = vadd.f32 %v833, %v943
    %v946 = vadd.f32 %v836, %v943
    %v947 = vmul.f32 %v917, 2.0
    %v948 = vmul.f32 %v922, 2.0
    %v949 = vsub.f32 %v945, %v947
    %v950 = vsub.f32 %v946, %v948
    %v951 = vmax.f32 %v949, 0.0
    %v952 = vmax.f32 %v950, 0.0
    %v953 = vrcp.pop 0.2
    %v954 = vmul.f32 %v951, %v953
    %v955 = vmul.f32 %v952, %v953
    %v956 = vadd.f32 %v954, 1.0
    %v957 = vadd.f32 %v955, 1.0
    %v958 = vadd.f32 %v956, 1e-08
    %v959 = vadd.f32 %v957, 1e-08
    %v960 = vrcp.pop %v958
    %v961 = vmul.f32 1.0, %v960
    %v962 = vrcp.pop %v959
    %v963 = vmul.f32 1.0, %v962
    %v964 = vpow.f32 %v961, 1.2
    %v965 = vpow.f32 %v963, 1.2
    %v966 = vrcp.pop 2.0
    %v967 = vmul.f32 %v964, %v966
    %v968 = vmul.f32 %v965, %v966
    %v969 = vsel %vm44, %v967, 0.0
    %970 = vadd.xlane.f32.xlu0 %v969
    %v971 = vpop.xlane.xlu0 %970
    %v972 = vsel %vm44, %v968, 0.0
    %973 = vadd.xlane.f32.xlu0 %v972
    %v974 = vpop.xlane.xlu0 %973
    %v975 = vrcp.pop %v971
    %v976 = vmul.f32 %v967, %v975
    %v977 = vrcp.pop %v974
    %v978 = vmul.f32 %v968, %v977
    %979 = vrot.lane.b32.xlu0 %v507, 32
    %v980 = vpop.permute.xlu0 %979
    %981 = vrot.lane.b32.xlu0 %v508, 32
    %v982 = vpop.permute.xlu0 %981
    %987 = vrot.lane.b32.xlu0 %v976, 64
    %v988 = vpop.permute.xlu0 %987
    %989 = vrot.lane.b32.xlu0 %v978, 64
    %v990 = vpop.permute.xlu0 %989
    %v993 = vsel %vm402, %v827, %v980
    %v994 = vsel %vm402, %v828, %v982
    %vm995 = vcmask 523264
    %v996 = vsel %vm995, %v993, %v988
    %v997 = vsel %vm995, %v994, %v990
    %vm998 = vcmask 588800
    %999 = vst.msk [vmem:[#allocation2] sm:$0xff] %vm998, %v996
    %1000 = vst.msk [vmem:[#allocation2 + $0x8] sm:$0xff] %vm998, %v997
    // Predicated region
    $region26: #{tpu_custom_call.1} parent=1 // pred_check
      _
    $region27: #{tpu_custom_call.1} parent=1 // pred_check_branch
      %1002 = sbr.rel (0) target = $region29
    $region28: #{tpu_custom_call.1} parent=1 // pred_region
      %s1004 = ssub.s32 256, 256
      %1005 = vsyncadd [#allocation3], %s1004
      %s1006 = sshll.u32 [#allocation2], 4
      %s1007 = int_to_ptr.vmem [resolvable:$true] %s1006
      %1012 = dma.vmem_to_hbm [thread:$0]  %s1007, 256, %s6, [#allocation3], 128, 128, 8
    $region29: #{tpu_custom_call.1} parent=1 // pred_fallthru
      _
    // Predicated region
    $region30: #{tpu_custom_call.1} parent=1 // pred_check
      _
    $region31: #{tpu_custom_call.1} parent=1 // pred_check_branch
      %1014 = sbr.rel (0) target = $region33
    $region32: #{tpu_custom_call.1} parent=1 // pred_region
      %1015 = dma.done [#allocation3], 256
    $region33: #{tpu_custom_call.1} parent=1 // pred_fallthru
      _
    %1016 = vsyncpa [#allocation3], 1

</llo_original>
